<compile_context>
chip_gen: v5e
topology: v5e:2x2
jax: 0.10.0
libtpu: 0.0.40
codegen_flags: <defaults>
</compile_context>

<pallas_src>
import jax
import jax.numpy as jnp
from jax.experimental import pallas as pl
from jax.experimental.pallas import tpu as pltpu


# ---------------------------------------------------------------------------
# Kernel bodies
# ---------------------------------------------------------------------------

def _matmul_kernel_single_k(a_ref, b_ref, o_ref):
    """K fits in one tile: straight MXU matmul, no reduction bookkeeping."""
    o_ref[...] = jnp.dot(
        a_ref[...], b_ref[...], preferred_element_type=jnp.float32
    ).astype(o_ref.dtype)


def _matmul_kernel_f32_out(a_ref, b_ref, o_ref):
    """f32 output: accumulate directly into the resident output block."""
    @pl.when(pl.program_id(2) == 0)
    def _():
        o_ref[...] = jnp.zeros_like(o_ref)

    o_ref[...] += jnp.dot(
        a_ref[...], b_ref[...], preferred_element_type=jnp.float32
    )


def _matmul_kernel_acc(a_ref, b_ref, o_ref, acc_ref):
    """Low-precision output: f32 VMEM accumulator, cast on the last k step."""
    @pl.when(pl.program_id(2) == 0)
    def _():
        acc_ref[...] = jnp.zeros_like(acc_ref)

    acc_ref[...] += jnp.dot(
        a_ref[...], b_ref[...], preferred_element_type=jnp.float32
    )

    @pl.when(pl.program_id(2) == pl.num_programs(2) - 1)
    def _():
        o_ref[...] = acc_ref[...].astype(o_ref.dtype)


# ---------------------------------------------------------------------------
# Tile selection (returns (tile, padded_dim))
# ---------------------------------------------------------------------------

def _choose_tile(dim: int, cap: int, align: int) -> tuple[int, int]:
    """Largest tile <= cap.

    Preference order:
      1. dim <= cap            -> full extent (block == full dim, always legal)
      2. aligned divisor of dim (multiples of `align`: lane=128 / sublane=8)
      3. no aligned divisor    -> tile = aligned cap, pad dim up to a multiple
    """
    if dim <= cap:
        return dim, dim
    t = (cap // align) * align
    while t >= align:
        if dim % t == 0:
            return t, dim
        t -= align
    tile = (cap // align) * align
    padded = ((dim + tile - 1) // tile) * tile
    return tile, padded


# ---------------------------------------------------------------------------
# Wrapper
# ---------------------------------------------------------------------------

def matmul(a: jax.Array, b: jax.Array, *, tm: int | None = None,
           tn: int | None = None, tk: int | None = None,
           vmem_limit_bytes: int | None = None) -> jax.Array:
    """out = a @ b via a Pallas TPU kernel with f32 MXU accumulation.

    Default tile caps (512 x 512 output tile, K tile of 512 for f32 /
    1024 for 16-bit inputs) keep double-buffered A + B + accumulator at
    ~5-7 MiB of VMEM, inside the default scoped budget on v5e/v6e/v7x.
    """
    M, K = a.shape
    K2, N = b.shape
    assert K == K2, f"inner dims must match, got {K} and {K2}"

    out_dtype = jnp.promote_types(a.dtype, b.dtype)
    assert jnp.issubdtype(out_dtype, jnp.floating), (
        "only floating-point matmul is supported (TPU MXU has no general "
        "integer matmul path on newer generations)"
    )

    in_itemsize = max(jnp.dtype(a.dtype).itemsize, jnp.dtype(b.dtype).itemsize)
    # dtype-aware caps: 16-bit inputs afford a deeper K tile at equal VMEM.
    tm_cap = 512 if tm is None else tm
    tn_cap = 512 if tn is None else tn
    tk_cap = (1024 if in_itemsize <= 2 else 512) if tk is None else tk

    tm, Mp = _choose_tile(M, tm_cap, 8)     # sublane axis of A / output
    tn, Np = _choose_tile(N, tn_cap, 128)   # lane axis of B / output
    tk, Kp = _choose_tile(K, tk_cap, 128)   # lane axis of A, sublane axis of B

    # Zero-pad ragged shapes up to the tile grid (K padding adds zero
    # contributions; extra M/N rows/cols are sliced off afterwards).
    if (Mp, Kp) != (M, K):
        a = jnp.pad(a, ((0, Mp - M), (0, Kp - K)))
    if (Kp, Np) != (K, N):
        b = jnp.pad(b, ((0, Kp - K), (0, Np - N)))
    assert Mp % tm == 0 and Np % tn == 0 and Kp % tk == 0

    itemsize_out = jnp.dtype(out_dtype).itemsize
    cost = pl.CostEstimate(
        flops=2 * Mp * Np * Kp,
        transcendentals=0,
        bytes_accessed=(Mp * Kp * jnp.dtype(a.dtype).itemsize
                        + Kp * Np * jnp.dtype(b.dtype).itemsize
                        + Mp * Np * itemsize_out),
    )

    cp_kwargs = {}
    if vmem_limit_bytes is not None:
        cp_kwargs["vmem_limit_bytes"] = vmem_limit_bytes

    n_k = Kp // tk

    if n_k == 1:
        # Whole K fits in one tile: 2-D grid, no reduction axis at all.
        grid_spec = pltpu.PrefetchScalarGridSpec(
            num_scalar_prefetch=0,
            grid=(Mp // tm, Np // tn),
            in_specs=[
                pl.BlockSpec((tm, Kp), lambda i, j: (i, 0)),
                pl.BlockSpec((Kp, tn), lambda i, j: (0, j)),
            ],
            out_specs=pl.BlockSpec((tm, tn), lambda i, j: (i, j)),
        )
        out = pl.pallas_call(
            _matmul_kernel_single_k,
            out_shape=jax.ShapeDtypeStruct((Mp, Np), out_dtype),
            grid_spec=grid_spec,
            compiler_params=pltpu.CompilerParams(
                dimension_semantics=("parallel", "parallel"), **cp_kwargs),
            cost_estimate=cost,
        )(a, b)
    else:
        # Reduction over K (innermost, "arbitrary" axis). The output block is
        # resident across k; for f32 output we accumulate into it directly.
        f32_out = out_dtype == jnp.float32
        kernel = _matmul_kernel_f32_out if f32_out else _matmul_kernel_acc
        scratch = [] if f32_out else [pltpu.VMEM((tm, tn), jnp.float32)]

        grid_spec = pltpu.PrefetchScalarGridSpec(
            num_scalar_prefetch=0,
            grid=(Mp // tm, Np // tn, n_k),
            in_specs=[
                pl.BlockSpec((tm, tk), lambda i, j, k: (i, k)),
                pl.BlockSpec((tk, tn), lambda i, j, k: (k, j)),
            ],
            out_specs=pl.BlockSpec((tm, tn), lambda i, j, k: (i, j)),
            scratch_shapes=scratch,
        )
        out = pl.pallas_call(
            kernel,
            out_shape=jax.ShapeDtypeStruct((Mp, Np), out_dtype),
            grid_spec=grid_spec,
            compiler_params=pltpu.CompilerParams(
                dimension_semantics=("parallel", "parallel", "arbitrary"),
                **cp_kwargs),
            cost_estimate=cost,
        )(a, b)

    if (Mp, Np) != (M, N):
        out = out[:M, :N]
    return out


# ---------------------------------------------------------------------------
# Demo / correctness check
# ---------------------------------------------------------------------------

if __name__ == "__main__":
    key = jax.random.PRNGKey(0)
    ka, kb, kc, kd, ke, kf = jax.random.split(key, 6)

    # Case 1: small f32 — single-K-tile fast path.
    M, K, N = 256, 128, 256
    a = jax.random.normal(ka, (M, K), dtype=jnp.float32)
    b = jax.random.normal(kb, (K, N), dtype=jnp.float32)
    out = jax.block_until_ready(matmul(a, b))
    ref = a @ b
    assert out.shape == ref.shape == (M, N)
    assert jnp.allclose(out, ref, atol=1e-3, rtol=1e-3), "case1 mismatch"

    # Case 2: f32 with a multi-step K reduction (forces tk=128 -> 2 k steps),
    # exercising the direct-into-output accumulation path.
    M2, K2, N2 = 256, 256, 256
    a2 = jax.random.normal(kc, (M2, K2), dtype=jnp.float32)
    b2 = jax.random.normal(kd, (K2, N2), dtype=jnp.float32)
    out2 = jax.block_until_ready(matmul(a2, b2, tk=128))
    ref2 = a2 @ b2
    assert jnp.allclose(out2, ref2, atol=1e-3, rtol=1e-3), "case2 mismatch"

    # Case 3: bf16 inputs with multi-step K, exercising the f32-scratch path.
    a3 = a2.astype(jnp.bfloat16)
    b3 = b2.astype(jnp.bfloat16)
    out3 = jax.block_until_ready(matmul(a3, b3, tk=128))
    ref3 = jnp.dot(a3, b3, preferred_element_type=jnp.float32).astype(jnp.bfloat16)
    assert out3.dtype == jnp.bfloat16
    assert jnp.allclose(out3.astype(jnp.float32), ref3.astype(jnp.float32),
                        atol=1e-1, rtol=2e-2), "case3 mismatch"

    # Case 4: ragged M with no aligned divisor (forces the pad-and-slice path,
    # small tm cap so the padding code is exercised at small scale).
    M4, K4, N4 = 130, 128, 256
    a4 = jax.random.normal(ke, (M4, K4), dtype=jnp.float32)
    b4 = jax.random.normal(kf, (K4, N4), dtype=jnp.float32)
    out4 = jax.block_until_ready(matmul(a4, b4, tm=64))
    ref4 = a4 @ b4
    assert out4.shape == (M4, N4)
    assert jnp.allclose(out4, ref4, atol=1e-3, rtol=1e-3), "case4 mismatch"

    print("KERNEL_OK")
</pallas_src>

<mosaic_0001>
module attributes {stable_mosaic.version = 11 : i64} {
  func.func @_matmul_kernel_single_k(%arg0: i32, %arg1: i32, %arg2: memref<256x128xf32, #tpu.memory_space<vmem>>, %arg3: memref<128x256xf32, #tpu.memory_space<vmem>>, %arg4: memref<256x256xf32, #tpu.memory_space<vmem>>) attributes {dimension_semantics = [#tpu.dimension_semantics<parallel>, #tpu.dimension_semantics<parallel>], iteration_bounds = array<i64: 1, 1>, scalar_prefetch = 0 : i64, scratch_operands = 0 : i64, tpu.core_type = #tpu.core_type<tc>, window_params = [{transform_indices = @transform_0, window_bounds = array<i64: 256, 128>}, {transform_indices = @transform_1, window_bounds = array<i64: 128, 256>}, {transform_indices = @transform_2, window_bounds = array<i64: 256, 256>}]} {
    %c0 = arith.constant 0 : index
    %c0_0 = arith.constant 0 : index
    %0 = vector.load %arg2[%c0, %c0_0] : memref<256x128xf32, #tpu.memory_space<vmem>>, vector<256x128xf32>
    %c0_1 = arith.constant 0 : index
    %c0_2 = arith.constant 0 : index
    %1 = vector.load %arg3[%c0_1, %c0_2] : memref<128x256xf32, #tpu.memory_space<vmem>>, vector<128x256xf32>
    %cst = arith.constant dense<0.000000e+00> : vector<256x256xf32>
    %2 = tpu.matmul %0, %1, %cst {dimension_numbers = #tpu.dot_dimension_numbers<[1], [0], [0], [1], [0, 0, 1, 1], [], []>} : vector<256x128xf32>, vector<128x256xf32>, vector<256x256xf32> -> vector<256x256xf32>
    %c0_3 = arith.constant 0 : index
    %c0_4 = arith.constant 0 : index
    %3 = vector.load %arg4[%c0_3, %c0_4] : memref<256x256xf32, #tpu.memory_space<vmem>>, vector<256x256xf32>
    tpu.vector_store %arg4[%c0_3, %c0_4], %2 {strides = array<i32>} : memref<256x256xf32, #tpu.memory_space<vmem>>, vector<256x256xf32>,
    return
  }
  func.func @transform_0(%arg0: i32, %arg1: i32) -> (i32, i32) {
    %c0_i32 = arith.constant 0 : i32
    %c0_i32_0 = arith.constant 0 : i32
    return %arg0, %c0_i32 : i32, i32
  }
  func.func @transform_1(%arg0: i32, %arg1: i32) -> (i32, i32) {
    %c0_i32 = arith.constant 0 : i32
    %c0_i32_0 = arith.constant 0 : i32
    return %c0_i32, %arg1 : i32, i32
  }
  func.func @transform_2(%arg0: i32, %arg1: i32) -> (i32, i32) {
    %c0_i32 = arith.constant 0 : i32
    return %arg0, %arg1 : i32, i32
  }
}

</mosaic_0001>

<llo_original>
// kernel: tpu_custom_call.1
$region0: #{tpu_custom_call.1}
  #allocation0 [shape = 'u32[]', space=smem, size = 0x4, offset = 0x4, fixed_abs, tag = 'smem constant byte address 0x4 - core index']
  #allocation1 [shape = 'u32[72,128]{1,0:T(1,128)}', space=vmem, size = 0x9000, scoped, tag = 'internal scratch']
  %s0 = inlined_call_operand.hbm [shape: f32[256,128], index: 0, kind: input, shape index: {}]
  %s1 = inlined_call_operand.hbm [shape: f32[128,256], index: 1, kind: input, shape index: {}]
  %s2 = inlined_call_operand.hbm [shape: f32[256,256], index: 2, kind: output, shape index: {}]
  %s3 = sld [smem:[#allocation0]]
  $region26: #{tpu_custom_call.1} parent=0
    _
  %s5 = ssub.s32 1, %s3
  %s6 = scalar_select 0, %s5, %s3
  $region1: #{tpu_custom_call.1} parent=0
    #allocation2 [shape = 'u8[131072]{0}', space=vmem, size = 0x20000, scoped, tag = 'input window, operand 0, single buffered']
    #allocation3 [shape = 's32[1]{0}', space=sflag, size = 0x4, scoped, tag = 'scoped memory for tpu_custom_call.1']
    #allocation4 [shape = 's32[1]{0}', space=sflag, size = 0x4, scoped, tag = 'scoped memory for tpu_custom_call.1']
    #allocation5 [shape = 'u8[131072]{0}', space=vmem, size = 0x20000, scoped, tag = 'input window, operand 1, single buffered']
    #allocation6 [shape = 's32[1]{0}', space=sflag, size = 0x4, scoped, tag = 'scoped memory for tpu_custom_call.1']
    #allocation7 [shape = 'u8[262144]{0}', space=vmem, size = 0x40000, scoped, tag = 'output window, operand 0, single buffered']
    %7 = vsyncpa [#allocation3], 0
    %8 = vsyncpa [#allocation6], 0
    %9 = vsyncpa [#allocation4], 0
    // Predicated region
    $region2: #{tpu_custom_call.1} parent=1 // pred_check
      _
    $region3: #{tpu_custom_call.1} parent=1 // pred_check_branch
      %11 = sbr.rel (0) target = $region5
    $region4: #{tpu_custom_call.1} parent=1 // pred_region
      %13 = vsyncadd [#allocation3], 0
      %s14 = sshll.u32 %s0, 4
      %s15 = int_to_ptr.hbm [resolvable:$true] %s14
      %s16 = sshll.u32 [#allocation2], 4
      %s17 = int_to_ptr.vmem [resolvable:$true] %s16
      %22 = dma.hbm_to_vmem [thread:$0]  %s15, 4096, %s17, [#allocation3], 128, 128, 8
    $region5: #{tpu_custom_call.1} parent=1 // pred_fallthru
      _
    // Predicated region
    $region6: #{tpu_custom_call.1} parent=1 // pred_check
      _
    $region7: #{tpu_custom_call.1} parent=1 // pred_check_branch
      %24 = sbr.rel (0) target = $region9
    $region8: #{tpu_custom_call.1} parent=1 // pred_region
      %26 = vsyncadd [#allocation6], 0
      %s27 = sshll.u32 %s1, 4
      %s28 = int_to_ptr.hbm [resolvable:$true] %s27
      %s29 = sshll.u32 [#allocation5], 4
      %s30 = int_to_ptr.vmem [resolvable:$true] %s29
      %35 = dma.hbm_to_vmem [thread:$0]  %s28, 4096, %s30, [#allocation6], 256, 256, 16
    $region9: #{tpu_custom_call.1} parent=1 // pred_fallthru
      _
    // Predicated region
    $region10: #{tpu_custom_call.1} parent=1 // pred_check
      _
    $region11: #{tpu_custom_call.1} parent=1 // pred_check_branch
      %37 = sbr.rel (0) target = $region13
    $region12: #{tpu_custom_call.1} parent=1 // pred_region
      %39 = dma.done [#allocation3], 4096
    $region13: #{tpu_custom_call.1} parent=1 // pred_fallthru
      _
    // Predicated region
    $region14: #{tpu_custom_call.1} parent=1 // pred_check
      _
    $region15: #{tpu_custom_call.1} parent=1 // pred_check_branch
      %41 = sbr.rel (0) target = $region17
    $region16: #{tpu_custom_call.1} parent=1 // pred_region
      %43 = dma.done [#allocation6], 4096
    $region17: #{tpu_custom_call.1} parent=1 // pred_fallthru
      _
    %v44 = vld [vmem:[#allocation2] sm:$0xff]
    %v45 = vld [vmem:[#allocation2 + $0x8] sm:$0xff]
    %v46 = vld [vmem:[#allocation2 + $0x10] sm:$0xff]
    %v47 = vld [vmem:[#allocation2 + $0x18] sm:$0xff]
    %v48 = vld [vmem:[#allocation2 + $0x20] sm:$0xff]
    %v49 = vld [vmem:[#allocation2 + $0x28] sm:$0xff]
    %v50 = vld [vmem:[#allocation2 + $0x30] sm:$0xff]
    %v51 = vld [vmem:[#allocation2 + $0x38] sm:$0xff]
    %v52 = vld [vmem:[#allocation2 + $0x40] sm:$0xff]
    %v53 = vld [vmem:[#allocation2 + $0x48] sm:$0xff]
    %v54 = vld [vmem:[#allocation2 + $0x50] sm:$0xff]
    %v55 = vld [vmem:[#allocation2 + $0x58] sm:$0xff]
    %v56 = vld [vmem:[#allocation2 + $0x60] sm:$0xff]
    %v57 = vld [vmem:[#allocation2 + $0x68] sm:$0xff]
    %v58 = vld [vmem:[#allocation2 + $0x70] sm:$0xff]
    %v59 = vld [vmem:[#allocation2 + $0x78] sm:$0xff]
    %v60 = vld [vmem:[#allocation2 + $0x80] sm:$0xff]
    %v61 = vld [vmem:[#allocation2 + $0x88] sm:$0xff]
    %v62 = vld [vmem:[#allocation2 + $0x90] sm:$0xff]
    %v63 = vld [vmem:[#allocation2 + $0x98] sm:$0xff]
    %v64 = vld [vmem:[#allocation2 + $0xa0] sm:$0xff]
    %v65 = vld [vmem:[#allocation2 + $0xa8] sm:$0xff]
    %v66 = vld [vmem:[#allocation2 + $0xb0] sm:$0xff]
    %v67 = vld [vmem:[#allocation2 + $0xb8] sm:$0xff]
    %v68 = vld [vmem:[#allocation2 + $0xc0] sm:$0xff]
    %v69 = vld [vmem:[#allocation2 + $0xc8] sm:$0xff]
    %v70 = vld [vmem:[#allocation2 + $0xd0] sm:$0xff]
    %v71 = vld [vmem:[#allocation2 + $0xd8] sm:$0xff]
    %v72 = vld [vmem:[#allocation2 + $0xe0] sm:$0xff]
    %v73 = vld [vmem:[#allocation2 + $0xe8] sm:$0xff]
    %v74 = vld [vmem:[#allocation2 + $0xf0] sm:$0xff]
    %v75 = vld [vmem:[#allocation2 + $0xf8] sm:$0xff]
    %v76 = vld [vmem:[#allocation5] sm:$0xff]
    %v77 = vld [vmem:[#allocation5 + $0x8] sm:$0xff]
    %v78 = vld [vmem:[#allocation5 + $0x10] sm:$0xff]
    %v79 = vld [vmem:[#allocation5 + $0x18] sm:$0xff]
    %v80 = vld [vmem:[#allocation5 + $0x20] sm:$0xff]
    %v81 = vld [vmem:[#allocation5 + $0x28] sm:$0xff]
    %v82 = vld [vmem:[#allocation5 + $0x30] sm:$0xff]
    %v83 = vld [vmem:[#allocation5 + $0x38] sm:$0xff]
    %v84 = vld [vmem:[#allocation5 + $0x40] sm:$0xff]
    %v85 = vld [vmem:[#allocation5 + $0x48] sm:$0xff]
    %v86 = vld [vmem:[#allocation5 + $0x50] sm:$0xff]
    %v87 = vld [vmem:[#allocation5 + $0x58] sm:$0xff]
    %v88 = vld [vmem:[#allocation5 + $0x60] sm:$0xff]
    %v89 = vld [vmem:[#allocation5 + $0x68] sm:$0xff]
    %v90 = vld [vmem:[#allocation5 + $0x70] sm:$0xff]
    %v91 = vld [vmem:[#allocation5 + $0x78] sm:$0xff]
    %v92 = vld [vmem:[#allocation5 + $0x80] sm:$0xff]
    %v93 = vld [vmem:[#allocation5 + $0x88] sm:$0xff]
    %v94 = vld [vmem:[#allocation5 + $0x90] sm:$0xff]
    %v95 = vld [vmem:[#allocation5 + $0x98] sm:$0xff]
    %v96 = vld [vmem:[#allocation5 + $0xa0] sm:$0xff]
    %v97 = vld [vmem:[#allocation5 + $0xa8] sm:$0xff]
    %v98 = vld [vmem:[#allocation5 + $0xb0] sm:$0xff]
    %v99 = vld [vmem:[#allocation5 + $0xb8] sm:$0xff]
    %v100 = vld [vmem:[#allocation5 + $0xc0] sm:$0xff]
    %v101 = vld [vmem:[#allocation5 + $0xc8] sm:$0xff]
    %v102 = vld [vmem:[#allocation5 + $0xd0] sm:$0xff]
    %v103 = vld [vmem:[#allocation5 + $0xd8] sm:$0xff]
    %v104 = vld [vmem:[#allocation5 + $0xe0] sm:$0xff]
    %v105 = vld [vmem:[#allocation5 + $0xe8] sm:$0xff]
    %v106 = vld [vmem:[#allocation5 + $0xf0] sm:$0xff]
    %v107 = vld [vmem:[#allocation5 + $0xf8] sm:$0xff]
    %108 = vmatpush.msra.mxu0 %v106
    %109 = vmatpush.msra.mxu0 %v104
    %110 = vmatpush.msra.mxu0 %v102
    %111 = vmatpush.msra.mxu0 %v100
    %112 = vmatpush.msra.mxu0 %v98
    %113 = vmatpush.msra.mxu0 %v96
    %114 = vmatpush.msra.mxu0 %v94
    %115 = vmatpush.msra.mxu0 %v92
    %116 = vmatpush.msra.mxu0 %v90
    %117 = vmatpush.msra.mxu0 %v88
    %118 = vmatpush.msra.mxu0 %v86
    %119 = vmatpush.msra.mxu0 %v84
    %120 = vmatpush.msra.mxu0 %v82
    %121 = vmatpush.msra.mxu0 %v80
    %122 = vmatpush.msra.mxu0 %v78
    %123 = vmatpush.msra.mxu0 %v76
    %124 = vmatmul.f32.gmra.mxu0 %v44
    %v125 = vpop.f32.mrf.mxu0
    %v126 = vadd.f32 0.0, %v125
    %127 = vmatmul.f32.gmra.mxu0 %v45
    %v128 = vpop.f32.mrf.mxu0
    %v129 = vadd.f32 0.0, %v128
    %130 = vmatmul.f32.gmra.mxu0 %v46
    %v131 = vpop.f32.mrf.mxu0
    %v132 = vadd.f32 0.0, %v131
    %133 = vmatmul.f32.gmra.mxu0 %v47
    %v134 = vpop.f32.mrf.mxu0
    %v135 = vadd.f32 0.0, %v134
    %136 = vmatmul.f32.gmra.mxu0 %v48
    %v137 = vpop.f32.mrf.mxu0
    %v138 = vadd.f32 0.0, %v137
    %139 = vmatmul.f32.gmra.mxu0 %v49
    %v140 = vpop.f32.mrf.mxu0
    %v141 = vadd.f32 0.0, %v140
    %142 = vmatmul.f32.gmra.mxu0 %v50
    %v143 = vpop.f32.mrf.mxu0
    %v144 = vadd.f32 0.0, %v143
    %145 = vmatmul.f32.gmra.mxu0 %v51
    %v146 = vpop.f32.mrf.mxu0
    %v147 = vadd.f32 0.0, %v146
    %148 = vmatmul.f32.gmra.mxu0 %v52
    %v149 = vpop.f32.mrf.mxu0
    %v150 = vadd.f32 0.0, %v149
    %151 = vmatmul.f32.gmra.mxu0 %v53
    %v152 = vpop.f32.mrf.mxu0
    %v153 = vadd.f32 0.0, %v152
    %154 = vmatmul.f32.gmra.mxu0 %v54
    %v155 = vpop.f32.mrf.mxu0
    %v156 = vadd.f32 0.0, %v155
    %157 = vmatmul.f32.gmra.mxu0 %v55
    %v158 = vpop.f32.mrf.mxu0
    %v159 = vadd.f32 0.0, %v158
    %160 = vmatmul.f32.gmra.mxu0 %v56
    %v161 = vpop.f32.mrf.mxu0
    %v162 = vadd.f32 0.0, %v161
    %163 = vmatmul.f32.gmra.mxu0 %v57
    %v164 = vpop.f32.mrf.mxu0
    %v165 = vadd.f32 0.0, %v164
    %166 = vmatmul.f32.gmra.mxu0 %v58
    %v167 = vpop.f32.mrf.mxu0
    %v168 = vadd.f32 0.0, %v167
    %169 = vmatmul.f32.gmra.mxu0 %v59
    %v170 = vpop.f32.mrf.mxu0
    %v171 = vadd.f32 0.0, %v170
    %172 = vmatmul.f32.gmra.mxu0 %v60
    %v173 = vpop.f32.mrf.mxu0
    %v174 = vadd.f32 0.0, %v173
    %175 = vmatmul.f32.gmra.mxu0 %v61
    %v176 = vpop.f32.mrf.mxu0
    %v177 = vadd.f32 0.0, %v176
    %178 = vmatmul.f32.gmra.mxu0 %v62
    %v179 = vpop.f32.mrf.mxu0
    %v180 = vadd.f32 0.0, %v179
    %181 = vmatmul.f32.gmra.mxu0 %v63
    %v182 = vpop.f32.mrf.mxu0
    %v183 = vadd.f32 0.0, %v182
    %184 = vmatmul.f32.gmra.mxu0 %v64
    %v185 = vpop.f32.mrf.mxu0
    %v186 = vadd.f32 0.0, %v185
    %187 = vmatmul.f32.gmra.mxu0 %v65
    %v188 = vpop.f32.mrf.mxu0
    %v189 = vadd.f32 0.0, %v188
    %190 = vmatmul.f32.gmra.mxu0 %v66
    %v191 = vpop.f32.mrf.mxu0
    %v192 = vadd.f32 0.0, %v191
    %193 = vmatmul.f32.gmra.mxu0 %v67
    %v194 = vpop.f32.mrf.mxu0
    %v195 = vadd.f32 0.0, %v194
    %196 = vmatmul.f32.gmra.mxu0 %v68
    %v197 = vpop.f32.mrf.mxu0
    %v198 = vadd.f32 0.0, %v197
    %199 = vmatmul.f32.gmra.mxu0 %v69
    %v200 = vpop.f32.mrf.mxu0
    %v201 = vadd.f32 0.0, %v200
    %202 = vmatmul.f32.gmra.mxu0 %v70
    %v203 = vpop.f32.mrf.mxu0
    %v204 = vadd.f32 0.0, %v203
    %205 = vmatmul.f32.gmra.mxu0 %v71
    %v206 = vpop.f32.mrf.mxu0
    %v207 = vadd.f32 0.0, %v206
    %208 = vmatmul.f32.gmra.mxu0 %v72
    %v209 = vpop.f32.mrf.mxu0
    %v210 = vadd.f32 0.0, %v209
    %211 = vmatmul.f32.gmra.mxu0 %v73
    %v212 = vpop.f32.mrf.mxu0
    %v213 = vadd.f32 0.0, %v212
    %214 = vmatmul.f32.gmra.mxu0 %v74
    %v215 = vpop.f32.mrf.mxu0
    %v216 = vadd.f32 0.0, %v215
    %217 = vmatmul.f32.gmra.mxu0 %v75
    %v218 = vpop.f32.mrf.mxu0
    %v219 = vadd.f32 0.0, %v218
    %220 = vdwg.mxu0
    %221 = vmatpush.msra.mxu0 %v107
    %222 = vmatpush.msra.mxu0 %v105
    %223 = vmatpush.msra.mxu0 %v103
    %224 = vmatpush.msra.mxu0 %v101
    %225 = vmatpush.msra.mxu0 %v99
    %226 = vmatpush.msra.mxu0 %v97
    %227 = vmatpush.msra.mxu0 %v95
    %228 = vmatpush.msra.mxu0 %v93
    %229 = vmatpush.msra.mxu0 %v91
    %230 = vmatpush.msra.mxu0 %v89
    %231 = vmatpush.msra.mxu0 %v87
    %232 = vmatpush.msra.mxu0 %v85
    %233 = vmatpush.msra.mxu0 %v83
    %234 = vmatpush.msra.mxu0 %v81
    %235 = vmatpush.msra.mxu0 %v79
    %236 = vmatpush.msra.mxu0 %v77
    %237 = vmatmul.f32.gmra.mxu0 %v44
    %v238 = vpop.f32.mrf.mxu0
    %v239 = vadd.f32 0.0, %v238
    %240 = vmatmul.f32.gmra.mxu0 %v45
    %v241 = vpop.f32.mrf.mxu0
    %v242 = vadd.f32 0.0, %v241
    %243 = vmatmul.f32.gmra.mxu0 %v46
    %v244 = vpop.f32.mrf.mxu0
    %v245 = vadd.f32 0.0, %v244
    %246 = vmatmul.f32.gmra.mxu0 %v47
    %v247 = vpop.f32.mrf.mxu0
    %v248 = vadd.f32 0.0, %v247
    %249 = vmatmul.f32.gmra.mxu0 %v48
    %v250 = vpop.f32.mrf.mxu0
    %v251 = vadd.f32 0.0, %v250
    %252 = vmatmul.f32.gmra.mxu0 %v49
    %v253 = vpop.f32.mrf.mxu0
    %v254 = vadd.f32 0.0, %v253
    %255 = vmatmul.f32.gmra.mxu0 %v50
    %v256 = vpop.f32.mrf.mxu0
    %v257 = vadd.f32 0.0, %v256
    %258 = vmatmul.f32.gmra.mxu0 %v51
    %v259 = vpop.f32.mrf.mxu0
    %v260 = vadd.f32 0.0, %v259
    %261 = vmatmul.f32.gmra.mxu0 %v52
    %v262 = vpop.f32.mrf.mxu0
    %v263 = vadd.f32 0.0, %v262
    %264 = vmatmul.f32.gmra.mxu0 %v53
    %v265 = vpop.f32.mrf.mxu0
    %v266 = vadd.f32 0.0, %v265
    %267 = vmatmul.f32.gmra.mxu0 %v54
    %v268 = vpop.f32.mrf.mxu0
    %v269 = vadd.f32 0.0, %v268
    %270 = vmatmul.f32.gmra.mxu0 %v55
    %v271 = vpop.f32.mrf.mxu0
    %v272 = vadd.f32 0.0, %v271
    %273 = vmatmul.f32.gmra.mxu0 %v56
    %v274 = vpop.f32.mrf.mxu0
    %v275 = vadd.f32 0.0, %v274
    %276 = vmatmul.f32.gmra.mxu0 %v57
    %v277 = vpop.f32.mrf.mxu0
    %v278 = vadd.f32 0.0, %v277
    %279 = vmatmul.f32.gmra.mxu0 %v58
    %v280 = vpop.f32.mrf.mxu0
    %v281 = vadd.f32 0.0, %v280
    %282 = vmatmul.f32.gmra.mxu0 %v59
    %v283 = vpop.f32.mrf.mxu0
    %v284 = vadd.f32 0.0, %v283
    %285 = vmatmul.f32.gmra.mxu0 %v60
    %v286 = vpop.f32.mrf.mxu0
    %v287 = vadd.f32 0.0, %v286
    %288 = vmatmul.f32.gmra.mxu0 %v61
    %v289 = vpop.f32.mrf.mxu0
    %v290 = vadd.f32 0.0, %v289
    %291 = vmatmul.f32.gmra.mxu0 %v62
    %v292 = vpop.f32.mrf.mxu0
    %v293 = vadd.f32 0.0, %v292
    %294 = vmatmul.f32.gmra.mxu0 %v63
    %v295 = vpop.f32.mrf.mxu0
    %v296 = vadd.f32 0.0, %v295
    %297 = vmatmul.f32.gmra.mxu0 %v64
    %v298 = vpop.f32.mrf.mxu0
    %v299 = vadd.f32 0.0, %v298
    %300 = vmatmul.f32.gmra.mxu0 %v65
    %v301 = vpop.f32.mrf.mxu0
    %v302 = vadd.f32 0.0, %v301
    %303 = vmatmul.f32.gmra.mxu0 %v66
    %v304 = vpop.f32.mrf.mxu0
    %v305 = vadd.f32 0.0, %v304
    %306 = vmatmul.f32.gmra.mxu0 %v67
    %v307 = vpop.f32.mrf.mxu0
    %v308 = vadd.f32 0.0, %v307
    %309 = vmatmul.f32.gmra.mxu0 %v68
    %v310 = vpop.f32.mrf.mxu0
    %v311 = vadd.f32 0.0, %v310
    %312 = vmatmul.f32.gmra.mxu0 %v69
    %v313 = vpop.f32.mrf.mxu0
    %v314 = vadd.f32 0.0, %v313
    %315 = vmatmul.f32.gmra.mxu0 %v70
    %v316 = vpop.f32.mrf.mxu0
    %v317 = vadd.f32 0.0, %v316
    %318 = vmatmul.f32.gmra.mxu0 %v71
    %v319 = vpop.f32.mrf.mxu0
    %v320 = vadd.f32 0.0, %v319
    %321 = vmatmul.f32.gmra.mxu0 %v72
    %v322 = vpop.f32.mrf.mxu0
    %v323 = vadd.f32 0.0, %v322
    %324 = vmatmul.f32.gmra.mxu0 %v73
    %v325 = vpop.f32.mrf.mxu0
    %v326 = vadd.f32 0.0, %v325
    %327 = vmatmul.f32.gmra.mxu0 %v74
    %v328 = vpop.f32.mrf.mxu0
    %v329 = vadd.f32 0.0, %v328
    %330 = vmatmul.f32.gmra.mxu0 %v75
    %v331 = vpop.f32.mrf.mxu0
    %v332 = vadd.f32 0.0, %v331
    %333 = vdwg.mxu0
    %334 = vst [vmem:[#allocation7] sm:$0xff] %v126
    %335 = vst [vmem:[#allocation7 + $0x8] sm:$0xff] %v239
    %336 = vst [vmem:[#allocation7 + $0x10] sm:$0xff] %v129
    %337 = vst [vmem:[#allocation7 + $0x18] sm:$0xff] %v242
    %338 = vst [vmem:[#allocation7 + $0x20] sm:$0xff] %v132
    %339 = vst [vmem:[#allocation7 + $0x28] sm:$0xff] %v245
    %340 = vst [vmem:[#allocation7 + $0x30] sm:$0xff] %v135
    %341 = vst [vmem:[#allocation7 + $0x38] sm:$0xff] %v248
    %342 = vst [vmem:[#allocation7 + $0x40] sm:$0xff] %v138
    %343 = vst [vmem:[#allocation7 + $0x48] sm:$0xff] %v251
    %344 = vst [vmem:[#allocation7 + $0x50] sm:$0xff] %v141
    %345 = vst [vmem:[#allocation7 + $0x58] sm:$0xff] %v254
    %346 = vst [vmem:[#allocation7 + $0x60] sm:$0xff] %v144
    %347 = vst [vmem:[#allocation7 + $0x68] sm:$0xff] %v257
    %348 = vst [vmem:[#allocation7 + $0x70] sm:$0xff] %v147
    %349 = vst [vmem:[#allocation7 + $0x78] sm:$0xff] %v260
    %350 = vst [vmem:[#allocation7 + $0x80] sm:$0xff] %v150
    %351 = vst [vmem:[#allocation7 + $0x88] sm:$0xff] %v263
    %352 = vst [vmem:[#allocation7 + $0x90] sm:$0xff] %v153
    %353 = vst [vmem:[#allocation7 + $0x98] sm:$0xff] %v266
    %354 = vst [vmem:[#allocation7 + $0xa0] sm:$0xff] %v156
    %355 = vst [vmem:[#allocation7 + $0xa8] sm:$0xff] %v269
    %356 = vst [vmem:[#allocation7 + $0xb0] sm:$0xff] %v159
    %357 = vst [vmem:[#allocation7 + $0xb8] sm:$0xff] %v272
    %358 = vst [vmem:[#allocation7 + $0xc0] sm:$0xff] %v162
    %359 = vst [vmem:[#allocation7 + $0xc8] sm:$0xff] %v275
    %360 = vst [vmem:[#allocation7 + $0xd0] sm:$0xff] %v165
    %361 = vst [vmem:[#allocation7 + $0xd8] sm:$0xff] %v278
    %362 = vst [vmem:[#allocation7 + $0xe0] sm:$0xff] %v168
    %363 = vst [vmem:[#allocation7 + $0xe8] sm:$0xff] %v281
    %364 = vst [vmem:[#allocation7 + $0xf0] sm:$0xff] %v171
    %365 = vst [vmem:[#allocation7 + $0xf8] sm:$0xff] %v284
    %366 = vst [vmem:[#allocation7 + $0x100] sm:$0xff] %v174
    %367 = vst [vmem:[#allocation7 + $0x108] sm:$0xff] %v287
    %368 = vst [vmem:[#allocation7 + $0x110] sm:$0xff] %v177
    %369 = vst [vmem:[#allocation7 + $0x118] sm:$0xff] %v290
    %370 = vst [vmem:[#allocation7 + $0x120] sm:$0xff] %v180
    %371 = vst [vmem:[#allocation7 + $0x128] sm:$0xff] %v293
    %372 = vst [vmem:[#allocation7 + $0x130] sm:$0xff] %v183
    %373 = vst [vmem:[#allocation7 + $0x138] sm:$0xff] %v296
    %374 = vst [vmem:[#allocation7 + $0x140] sm:$0xff] %v186
    %375 = vst [vmem:[#allocation7 + $0x148] sm:$0xff] %v299
    %376 = vst [vmem:[#allocation7 + $0x150] sm:$0xff] %v189
    %377 = vst [vmem:[#allocation7 + $0x158] sm:$0xff] %v302
    %378 = vst [vmem:[#allocation7 + $0x160] sm:$0xff] %v192
    %379 = vst [vmem:[#allocation7 + $0x168] sm:$0xff] %v305
    %380 = vst [vmem:[#allocation7 + $0x170] sm:$0xff] %v195
    %381 = vst [vmem:[#allocation7 + $0x178] sm:$0xff] %v308
    %382 = vst [vmem:[#allocation7 + $0x180] sm:$0xff] %v198
    %383 = vst [vmem:[#allocation7 + $0x188] sm:$0xff] %v311
    %384 = vst [vmem:[#allocation7 + $0x190] sm:$0xff] %v201
    %385 = vst [vmem:[#allocation7 + $0x198] sm:$0xff] %v314
    %386 = vst [vmem:[#allocation7 + $0x1a0] sm:$0xff] %v204
    %387 = vst [vmem:[#allocation7 + $0x1a8] sm:$0xff] %v317
    %388 = vst [vmem:[#allocation7 + $0x1b0] sm:$0xff] %v207
    %389 = vst [vmem:[#allocation7 + $0x1b8] sm:$0xff] %v320
    %390 = vst [vmem:[#allocation7 + $0x1c0] sm:$0xff] %v210
    %391 = vst [vmem:[#allocation7 + $0x1c8] sm:$0xff] %v323
    %392 = vst [vmem:[#allocation7 + $0x1d0] sm:$0xff] %v213
    %393 = vst [vmem:[#allocation7 + $0x1d8] sm:$0xff] %v326
    %394 = vst [vmem:[#allocation7 + $0x1e0] sm:$0xff] %v216
    %395 = vst [vmem:[#allocation7 + $0x1e8] sm:$0xff] %v329
    %396 = vst [vmem:[#allocation7 + $0x1f0] sm:$0xff] %v219
    %397 = vst [vmem:[#allocation7 + $0x1f8] sm:$0xff] %v332
    // Predicated region
    $region18: #{tpu_custom_call.1} parent=1 // pred_check
      _
    $region19: #{tpu_custom_call.1} parent=1 // pred_check_branch
      %399 = sbr.rel (0) target = $region21
    $region20: #{tpu_custom_call.1} parent=1 // pred_region
      %401 = vsyncadd [#allocation4], 0
      %s402 = sshll.u32 [#allocation7], 4
      %s403 = int_to_ptr.vmem [resolvable:$true] %s402
      %s404 = sshll.u32 %s2, 4
      %s405 = int_to_ptr.hbm [resolvable:$true] %s404
      %410 = dma.vmem_to_hbm [thread:$0]  %s403, 8192, %s405, [#allocation4], 256, 256, 16
    $region21: #{tpu_custom_call.1} parent=1 // pred_fallthru
      _
    // Predicated region
    $region22: #{tpu_custom_call.1} parent=1 // pred_check
      _
    $region23: #{tpu_custom_call.1} parent=1 // pred_check_branch
      %412 = sbr.rel (0) target = $region25
    $region24: #{tpu_custom_call.1} parent=1 // pred_region
      %414 = dma.done [#allocation4], 8192
    $region25: #{tpu_custom_call.1} parent=1 // pred_fallthru
      _
    %415 = vsyncpa [#allocation3], 1
    %416 = vsyncpa [#allocation6], 1
    %417 = vsyncpa [#allocation4], 1

</llo_original>
